<compile_context>
chip_gen: v5e
topology: v5e:2x2
jax: 0.10.0
libtpu: 0.0.40
codegen_flags: <defaults>
</compile_context>

<pallas_src>
from functools import partial

import jax
import jax.numpy as jnp
import numpy as np
from jax.experimental import pallas as pl
from jax.experimental.pallas import tpu as pltpu


# ----------------------------------------------------------------------------
# tiling heuristics
# ----------------------------------------------------------------------------
_WORKSET_ELEMS = 512 * 1024  # ~2 MiB f32 for the widest per-block temporary


def _pick_pack_factor(m, out_dim, widest, max_lanes=1024):
    """Smallest power-of-two divisor r of m with r*out_dim >= ~128 lanes."""
    target = -(-128 // max(out_dim, 1))  # ceil(128 / out_dim)
    r = 1
    for c in (1, 2, 4, 8, 16, 32, 64, 128):
        if m % c == 0 and c * widest <= max_lanes:
            r = c
            if c >= target:
                break
    return r


def _pick_tile_rows(mp, per_row_elems, max_tile_rows):
    """Largest sublane-aligned divisor of mp within the VMEM budget."""
    budget_rows = max(8, _WORKSET_ELEMS // max(per_row_elems, 1))
    cap = min(max_tile_rows, budget_rows)
    for c in (1024, 512, 256, 128, 64, 32, 16, 8):
        if c <= cap and mp % c == 0:
            return c
    return mp  # fall back to a single full-extent block (always legal)


# ----------------------------------------------------------------------------
# fused two-linear kernel:  y = (x @ W1 + b1) @ W2 + b2
# (W1/W2 arrive already block-diagonal-expanded; x arrives row-packed.)
# ----------------------------------------------------------------------------
def _relpos_kernel(x_ref, w1_ref, b1_ref, w2_ref, b2_ref, o_ref, *, mxu_dtype):
    h = jnp.dot(x_ref[...], w1_ref[...],
                preferred_element_type=jnp.float32) + b1_ref[...]
    y = jnp.dot(h.astype(mxu_dtype), w2_ref[...],
                preferred_element_type=jnp.float32) + b2_ref[...]
    o_ref[...] = y.astype(o_ref.dtype)


# ----------------------------------------------------------------------------
# module forward
# ----------------------------------------------------------------------------
def relative_position_forward(pos_mat, w1, b1, w2, b2, *,
                              compute_dtype=None, max_tile_rows=512):
    """pos_mat: (n, n, pos_dim) -> (n, n, out_dim)."""
    assert pos_mat.shape[0] == pos_mat.shape[1]
    n = pos_mat.shape[0]
    pos_dim = pos_mat.shape[-1]
    hidden = w1.shape[1]
    out_dim = w2.shape[1]
    M = n * n

    b1 = b1.reshape(1, hidden).astype(jnp.float32)
    b2 = b2.reshape(1, out_dim).astype(jnp.float32)

    # ---- pack r consecutive rows per packed row (lane-dense layout) --------
    widest = max(pos_dim, hidden, out_dim)
    r = _pick_pack_factor(M, out_dim, widest)
    Mp = M // r

    x_packed = pos_mat.reshape(Mp, r * pos_dim)          # free contiguous reshape
    eye_r = jnp.eye(r, dtype=w1.dtype)
    w1_blk = jnp.kron(eye_r, w1)                         # (r*pos_dim, r*hidden)
    w2_blk = jnp.kron(eye_r, w2)                         # (r*hidden, r*out_dim)
    b1_blk = jnp.tile(b1, (1, r))                        # (1, r*hidden)
    b2_blk = jnp.tile(b2, (1, r))                        # (1, r*out_dim)

    if compute_dtype is not None:                        # bf16 MXU operands (v6e/v7x)
        x_packed = x_packed.astype(compute_dtype)
        w1_blk = w1_blk.astype(compute_dtype)
        w2_blk = w2_blk.astype(compute_dtype)

    # ---- row tiling ---------------------------------------------------------
    tile_rows = _pick_tile_rows(Mp, r * widest, max_tile_rows)
    grid = (Mp // tile_rows,)

    flops = 2 * M * r * (pos_dim * hidden + hidden * out_dim)
    bytes_accessed = 4 * (M * (pos_dim + out_dim)
                          + r * r * (pos_dim * hidden + hidden * out_dim)
                          + r * (hidden + out_dim))
    cost = pl.CostEstimate(flops=flops, transcendentals=0,
                           bytes_accessed=bytes_accessed)

    out_packed = pl.pallas_call(
        partial(_relpos_kernel, mxu_dtype=w2_blk.dtype),
        out_shape=jax.ShapeDtypeStruct((Mp, r * out_dim), jnp.float32),
        grid=grid,
        in_specs=[
            pl.BlockSpec((tile_rows, r * pos_dim), lambda i: (i, 0)),
            pl.BlockSpec((r * pos_dim, r * hidden), lambda i: (0, 0)),
            pl.BlockSpec((1, r * hidden), lambda i: (0, 0)),
            pl.BlockSpec((r * hidden, r * out_dim), lambda i: (0, 0)),
            pl.BlockSpec((1, r * out_dim), lambda i: (0, 0)),
        ],
        out_specs=pl.BlockSpec((tile_rows, r * out_dim), lambda i: (i, 0)),
        compiler_params=pltpu.CompilerParams(
            dimension_semantics=("parallel",)),
        cost_estimate=cost,
    )(x_packed, w1_blk, b1_blk, w2_blk, b2_blk)

    # (Mp, r*out_dim) row-major == (M, out_dim) row-major -> free reshape back.
    return out_packed.reshape(n, n, out_dim)


# ----------------------------------------------------------------------------
# pure-JAX reference (mirrors the PyTorch forward exactly)
# ----------------------------------------------------------------------------
def reference_forward(pos_mat, w1, b1, w2, b2):
    n = pos_mat.shape[0]
    pos = pos_mat.reshape(-1, pos_mat.shape[-1])
    y = (pos @ w1 + b1.reshape(1, -1)) @ w2 + b2.reshape(1, -1)
    return y.reshape(n, n, -1)


# ----------------------------------------------------------------------------
def _make_case(key, n, pos_dim, hidden_dim, out_dim):
    ks = jax.random.split(key, 5)
    s = 0.1
    pos_mat = jax.random.normal(ks[0], (n, n, pos_dim), jnp.float32)
    w1 = jax.random.normal(ks[1], (pos_dim, hidden_dim), jnp.float32) * s
    b1 = jax.random.normal(ks[2], (hidden_dim,), jnp.float32) * s
    w2 = jax.random.normal(ks[3], (hidden_dim, out_dim), jnp.float32) * s
    b2 = jax.random.normal(ks[4], (out_dim,), jnp.float32) * s
    return pos_mat, w1, b1, w2, b2


if __name__ == "__main__":
    key = jax.random.PRNGKey(0)
    k1, k2, k3 = jax.random.split(key, 3)

    # Case 1: default small shapes (n=8, pos_dim=4, hidden=16, out=8),
    #         exercises row packing (r=16 -> 128-lane output tiles).
    args = _make_case(k1, n=8, pos_dim=4, hidden_dim=16, out_dim=8)
    out = jax.block_until_ready(relative_position_forward(*args))
    ref = reference_forward(*args)
    assert out.shape == (8, 8, 8)
    np.testing.assert_allclose(np.asarray(out), np.asarray(ref),
                               rtol=1e-5, atol=1e-5)

    # Case 2: odd n (no packing possible, single full block fallback).
    args2 = _make_case(k2, n=5, pos_dim=4, hidden_dim=8, out_dim=8)
    out2 = jax.block_until_ready(relative_position_forward(*args2))
    np.testing.assert_allclose(np.asarray(out2), np.asarray(reference_forward(*args2)),
                               rtol=1e-5, atol=1e-5)

    # Case 3: multi-step pipelined grid (small tile cap forces >1 grid steps).
    args3 = _make_case(k3, n=16, pos_dim=4, hidden_dim=8, out_dim=8)
    out3 = jax.block_until_ready(
        relative_position_forward(*args3, max_tile_rows=8))
    np.testing.assert_allclose(np.asarray(out3), np.asarray(reference_forward(*args3)),
                               rtol=1e-5, atol=1e-5)

    # Case 4: bf16 MXU-operand path (f32 accumulation), loose tolerance.
    out4 = jax.block_until_ready(
        relative_position_forward(*args, compute_dtype=jnp.bfloat16))
    np.testing.assert_allclose(np.asarray(out4), np.asarray(ref),
                               rtol=5e-2, atol=5e-2)

    print("KERNEL_OK")
</pallas_src>

<mosaic_0001>
module attributes {stable_mosaic.version = 11 : i64} {
  func.func @_relpos_kernel(%arg0: i32, %arg1: memref<4x64xf32, #tpu.memory_space<vmem>>, %arg2: memref<64x256xf32, #tpu.memory_space<vmem>>, %arg3: memref<1x256xf32, #tpu.memory_space<vmem>>, %arg4: memref<256x128xf32, #tpu.memory_space<vmem>>, %arg5: memref<1x128xf32, #tpu.memory_space<vmem>>, %arg6: memref<4x128xf32, #tpu.memory_space<vmem>>) attributes {dimension_semantics = [#tpu.dimension_semantics<parallel>], iteration_bounds = array<i64: 1>, scalar_prefetch = 0 : i64, scratch_operands = 0 : i64, tpu.core_type = #tpu.core_type<tc>, window_params = [{transform_indices = @transform_0, window_bounds = array<i64: 4, 64>}, {pipeline_mode = #tpu.pipeline_mode<synchronous>, transform_indices = @transform_1, window_bounds = array<i64: 64, 256>}, {pipeline_mode = #tpu.pipeline_mode<synchronous>, transform_indices = @transform_2, window_bounds = array<i64: 1, 256>}, {pipeline_mode = #tpu.pipeline_mode<synchronous>, transform_indices = @transform_3, window_bounds = array<i64: 256, 128>}, {pipeline_mode = #tpu.pipeline_mode<synchronous>, transform_indices = @transform_4, window_bounds = array<i64: 1, 128>}, {transform_indices = @transform_5, window_bounds = array<i64: 4, 128>}]} {
    %c0 = arith.constant 0 : index
    %c0_0 = arith.constant 0 : index
    %0 = vector.load %arg1[%c0, %c0_0] : memref<4x64xf32, #tpu.memory_space<vmem>>, vector<4x64xf32>
    %c0_1 = arith.constant 0 : index
    %c0_2 = arith.constant 0 : index
    %1 = vector.load %arg2[%c0_1, %c0_2] : memref<64x256xf32, #tpu.memory_space<vmem>>, vector<64x256xf32>
    %cst = arith.constant dense<0.000000e+00> : vector<4x256xf32>
    %2 = tpu.matmul %0, %1, %cst {dimension_numbers = #tpu.dot_dimension_numbers<[1], [0], [0], [1], [0, 0, 1, 1], [], []>} : vector<4x64xf32>, vector<64x256xf32>, vector<4x256xf32> -> vector<4x256xf32>
    %c0_3 = arith.constant 0 : index
    %c0_4 = arith.constant 0 : index
    %3 = vector.load %arg3[%c0_3, %c0_4] : memref<1x256xf32, #tpu.memory_space<vmem>>, vector<1x256xf32>
    %4 = vector.broadcast %3 : vector<1x256xf32> to vector<4x256xf32>
    %5 = arith.addf %2, %4 : vector<4x256xf32>
    %c0_5 = arith.constant 0 : index
    %c0_6 = arith.constant 0 : index
    %6 = vector.load %arg4[%c0_5, %c0_6] : memref<256x128xf32, #tpu.memory_space<vmem>>, vector<256x128xf32>
    %cst_7 = arith.constant dense<0.000000e+00> : vector<4x128xf32>
    %7 = tpu.matmul %5, %6, %cst_7 {dimension_numbers = #tpu.dot_dimension_numbers<[1], [0], [0], [1], [0, 0, 1, 1], [], []>} : vector<4x256xf32>, vector<256x128xf32>, vector<4x128xf32> -> vector<4x128xf32>
    %c0_8 = arith.constant 0 : index
    %c0_9 = arith.constant 0 : index
    %8 = vector.load %arg5[%c0_8, %c0_9] : memref<1x128xf32, #tpu.memory_space<vmem>>, vector<1x128xf32>
    %9 = vector.broadcast %8 : vector<1x128xf32> to vector<4x128xf32>
    %10 = arith.addf %7, %9 : vector<4x128xf32>
    %c0_10 = arith.constant 0 : index
    %c0_11 = arith.constant 0 : index
    %11 = vector.load %arg6[%c0_10, %c0_11] : memref<4x128xf32, #tpu.memory_space<vmem>>, vector<4x128xf32>
    tpu.vector_store %arg6[%c0_10, %c0_11], %10 {strides = array<i32>} : memref<4x128xf32, #tpu.memory_space<vmem>>, vector<4x128xf32>,
    return
  }
  func.func @transform_0(%arg0: i32) -> (i32, i32) {
    %c0_i32 = arith.constant 0 : i32
    %c0_i32_0 = arith.constant 0 : i32
    return %arg0, %c0_i32 : i32, i32
  }
  func.func @transform_1(%arg0: i32) -> (i32, i32) {
    %c0_i32 = arith.constant 0 : i32
    %c0_i32_0 = arith.constant 0 : i32
    %c0_i32_1 = arith.constant 0 : i32
    return %c0_i32, %c0_i32_0 : i32, i32
  }
  func.func @transform_2(%arg0: i32) -> (i32, i32) {
    %c0_i32 = arith.constant 0 : i32
    %c0_i32_0 = arith.constant 0 : i32
    %c0_i32_1 = arith.constant 0 : i32
    return %c0_i32, %c0_i32_0 : i32, i32
  }
  func.func @transform_3(%arg0: i32) -> (i32, i32) {
    %c0_i32 = arith.constant 0 : i32
    %c0_i32_0 = arith.constant 0 : i32
    %c0_i32_1 = arith.constant 0 : i32
    return %c0_i32, %c0_i32_0 : i32, i32
  }
  func.func @transform_4(%arg0: i32) -> (i32, i32) {
    %c0_i32 = arith.constant 0 : i32
    %c0_i32_0 = arith.constant 0 : i32
    %c0_i32_1 = arith.constant 0 : i32
    return %c0_i32, %c0_i32_0 : i32, i32
  }
  func.func @transform_5(%arg0: i32) -> (i32, i32) {
    %c0_i32 = arith.constant 0 : i32
    %c0_i32_0 = arith.constant 0 : i32
    return %arg0, %c0_i32 : i32, i32
  }
}

</mosaic_0001>

<llo_original>
// kernel: tpu_custom_call.1
$region0: #{tpu_custom_call.1}
  #allocation0 [shape = 'u32[]', space=smem, size = 0x4, offset = 0x4, fixed_abs, tag = 'smem constant byte address 0x4 - core index']
  #allocation1 [shape = 'u32[72,128]{1,0:T(1,128)}', space=vmem, size = 0x9000, scoped, tag = 'internal scratch']
  %s0 = inlined_call_operand.hbm [shape: f32[4,64], index: 0, kind: input, shape index: {}]
  %s1 = inlined_call_operand.hbm [shape: f32[64,256], index: 1, kind: input, shape index: {}]
  %s2 = inlined_call_operand.hbm [shape: f32[1,256], index: 2, kind: input, shape index: {}]
  %s3 = inlined_call_operand.hbm [shape: f32[256,128], index: 3, kind: input, shape index: {}]
  %s4 = inlined_call_operand.vmem [shape: f32[1,128], index: 4, kind: input, shape index: {}]
  %s5 = inlined_call_operand.hbm [shape: f32[4,128], index: 5, kind: output, shape index: {}]
  %s6 = sld [smem:[#allocation0]]
  $region46: #{tpu_custom_call.1} parent=0
    _
  %s8 = ssub.s32 1, %s6
  %s9 = scalar_select 0, %s8, %s6
  $region1: #{tpu_custom_call.1} parent=0
    #allocation2 [shape = 'u8[2048]{0}', space=vmem, size = 0x800, scoped, tag = 'input window, operand 0, single buffered']
    #allocation3 [shape = 's32[1]{0}', space=sflag, size = 0x4, scoped, tag = 'scoped memory for tpu_custom_call.1']
    #allocation4 [shape = 's32[1]{0}', space=sflag, size = 0x4, scoped, tag = 'scoped memory for tpu_custom_call.1']
    #allocation5 [shape = 'u8[65536]{0}', space=vmem, size = 0x10000, scoped, tag = 'input window, operand 1, single buffered']
    #allocation6 [shape = 's32[1]{0}', space=sflag, size = 0x4, scoped, tag = 'scoped memory for tpu_custom_call.1']
    #allocation7 [shape = 'u8[1024]{0}', space=vmem, size = 0x400, scoped, tag = 'input window, operand 2, single buffered']
    #allocation8 [shape = 'u8[131072]{0}', space=vmem, size = 0x20000, scoped, tag = 'input window, operand 3, single buffered']
    #allocation9 [shape = 's32[1]{0}', space=sflag, size = 0x4, scoped, tag = 'scoped memory for tpu_custom_call.1']
    #allocation10 [shape = 'u8[2048]{0}', space=vmem, size = 0x800, scoped, tag = 'output window, operand 0, single buffered']
    %10 = vsyncpa [#allocation3], 0
    %11 = vsyncpa [#allocation6], 0
    %12 = vsyncpa [#allocation9], 0
    %13 = vsyncpa [#allocation4], 0
    // Predicated region
    $region2: #{tpu_custom_call.1} parent=1 // pred_check
      _
    $region3: #{tpu_custom_call.1} parent=1 // pred_check_branch
      %15 = sbr.rel (0) target = $region5
    $region4: #{tpu_custom_call.1} parent=1 // pred_region
      %17 = vsyncadd [#allocation3], 0
      %s19 = sshll.u32 %s0, 4
      %s20 = int_to_ptr.hbm [resolvable:$true] %s19
      %s21 = sshll.u32 [#allocation2], 4
      %s22 = int_to_ptr.vmem [resolvable:$true] %s21
      %24 = dma.hbm_to_vmem [thread:$0]  %s20, 64, %s22, [#allocation3]
    $region5: #{tpu_custom_call.1} parent=1 // pred_fallthru
      _
    // Predicated region
    $region6: #{tpu_custom_call.1} parent=1 // pred_check
      _
    $region7: #{tpu_custom_call.1} parent=1 // pred_check_branch
      %26 = sbr.rel (0) target = $region9
    $region8: #{tpu_custom_call.1} parent=1 // pred_region
      %28 = vsyncadd [#allocation6], 0
      %s29 = sshll.u32 %s1, 4
      %s30 = int_to_ptr.hbm [resolvable:$true] %s29
      %s31 = sshll.u32 [#allocation5], 4
      %s32 = int_to_ptr.vmem [resolvable:$true] %s31
      %37 = dma.hbm_to_vmem [thread:$0]  %s30, 2048, %s32, [#allocation6], 256, 256, 16
    $region9: #{tpu_custom_call.1} parent=1 // pred_fallthru
      _
    // Predicated region
    $region10: #{tpu_custom_call.1} parent=1 // pred_check
      _
    $region11: #{tpu_custom_call.1} parent=1 // pred_check_branch
      %39 = sbr.rel (0) target = $region13
    $region12: #{tpu_custom_call.1} parent=1 // pred_region
      %41 = vsyncadd [#allocation6], 0
      %s43 = sshll.u32 %s2, 4
      %s44 = int_to_ptr.hbm [resolvable:$true] %s43
      %s45 = sshll.u32 [#allocation7], 4
      %s46 = int_to_ptr.vmem [resolvable:$true] %s45
      %48 = dma.hbm_to_vmem [thread:$0]  %s44, 32, %s46, [#allocation6]
    $region13: #{tpu_custom_call.1} parent=1 // pred_fallthru
      _
    // Predicated region
    $region14: #{tpu_custom_call.1} parent=1 // pred_check
      _
    $region15: #{tpu_custom_call.1} parent=1 // pred_check_branch
      %50 = sbr.rel (0) target = $region17
    $region16: #{tpu_custom_call.1} parent=1 // pred_region
      %52 = vsyncadd [#allocation9], 0
      %s53 = sshll.u32 %s3, 4
      %s54 = int_to_ptr.hbm [resolvable:$true] %s53
      %s55 = sshll.u32 [#allocation8], 4
      %s56 = int_to_ptr.vmem [resolvable:$true] %s55
      %61 = dma.hbm_to_vmem [thread:$0]  %s54, 4096, %s56, [#allocation9], 128, 128, 8
    $region17: #{tpu_custom_call.1} parent=1 // pred_fallthru
      _
    // Predicated region
    $region18: #{tpu_custom_call.1} parent=1 // pred_check
      _
    $region19: #{tpu_custom_call.1} parent=1 // pred_check_branch
      %63 = sbr.rel (0) target = $region21
    $region20: #{tpu_custom_call.1} parent=1 // pred_region
      _
    $region21: #{tpu_custom_call.1} parent=1 // pred_fallthru
      _
    // Predicated region
    $region22: #{tpu_custom_call.1} parent=1 // pred_check
      _
    $region23: #{tpu_custom_call.1} parent=1 // pred_check_branch
      %65 = sbr.rel (0) target = $region25
    $region24: #{tpu_custom_call.1} parent=1 // pred_region
      %67 = dma.done [#allocation3], 64
    $region25: #{tpu_custom_call.1} parent=1 // pred_fallthru
      _
    // Predicated region
    $region26: #{tpu_custom_call.1} parent=1 // pred_check
      _
    $region27: #{tpu_custom_call.1} parent=1 // pred_check_branch
      %69 = sbr.rel (0) target = $region29
    $region28: #{tpu_custom_call.1} parent=1 // pred_region
      %71 = dma.done [#allocation6], 2048
    $region29: #{tpu_custom_call.1} parent=1 // pred_fallthru
      _
    // Predicated region
    $region30: #{tpu_custom_call.1} parent=1 // pred_check
      _
    $region31: #{tpu_custom_call.1} parent=1 // pred_check_branch
      %73 = sbr.rel (0) target = $region33
    $region32: #{tpu_custom_call.1} parent=1 // pred_region
      %75 = dma.done [#allocation6], 32
    $region33: #{tpu_custom_call.1} parent=1 // pred_fallthru
      _
    // Predicated region
    $region34: #{tpu_custom_call.1} parent=1 // pred_check
      _
    $region35: #{tpu_custom_call.1} parent=1 // pred_check_branch
      %77 = sbr.rel (0) target = $region37
    $region36: #{tpu_custom_call.1} parent=1 // pred_region
      %79 = dma.done [#allocation9], 4096
    $region37: #{tpu_custom_call.1} parent=1 // pred_fallthru
      _
    %v80 = vld [vmem:[#allocation2] sm:$0xf]
    %v81 = vld [vmem:[#allocation5] sm:$0xff]
    %v82 = vld [vmem:[#allocation5 + $0x8] sm:$0xff]
    %v83 = vld [vmem:[#allocation5 + $0x10] sm:$0xff]
    %v84 = vld [vmem:[#allocation5 + $0x18] sm:$0xff]
    %v85 = vld [vmem:[#allocation5 + $0x20] sm:$0xff]
    %v86 = vld [vmem:[#allocation5 + $0x28] sm:$0xff]
    %v87 = vld [vmem:[#allocation5 + $0x30] sm:$0xff]
    %v88 = vld [vmem:[#allocation5 + $0x38] sm:$0xff]
    %v89 = vld [vmem:[#allocation5 + $0x40] sm:$0xff]
    %v90 = vld [vmem:[#allocation5 + $0x48] sm:$0xff]
    %v91 = vld [vmem:[#allocation5 + $0x50] sm:$0xff]
    %v92 = vld [vmem:[#allocation5 + $0x58] sm:$0xff]
    %v93 = vld [vmem:[#allocation5 + $0x60] sm:$0xff]
    %v94 = vld [vmem:[#allocation5 + $0x68] sm:$0xff]
    %v95 = vld [vmem:[#allocation5 + $0x70] sm:$0xff]
    %v96 = vld [vmem:[#allocation5 + $0x78] sm:$0xff]
    %v97 = vld [vmem:[#allocation7] sm:$0x3]
    %v99 = vperm.slane %v97, 0
    %v100 = vperm.slane %v97, 1
    %vm103 = vcmask 523264
    %v105 = vsel %vm103, %v80, 0
    %107 = vmatpush.msra.mxu0 0.0
    %108 = vmatpush.msra.mxu0 0.0
    %109 = vmatpush.msra.mxu0 0.0
    %110 = vmatpush.msra.mxu0 0.0
    %111 = vmatpush.msra.mxu0 0.0
    %112 = vmatpush.msra.mxu0 0.0
    %113 = vmatpush.msra.mxu0 0.0
    %114 = vmatpush.msra.mxu0 0.0
    %115 = vmatpush.msra.mxu0 %v95
    %116 = vmatpush.msra.mxu0 %v93
    %117 = vmatpush.msra.mxu0 %v91
    %118 = vmatpush.msra.mxu0 %v89
    %119 = vmatpush.msra.mxu0 %v87
    %120 = vmatpush.msra.mxu0 %v85
    %121 = vmatpush.msra.mxu0 %v83
    %122 = vmatpush.msra.mxu0 %v81
    %123 = vmatmul.f32.gmra.mxu0 %v105
    %v124 = vpop.f32.mrf.mxu0
    %v125 = vadd.f32 %v99, %v124
    %126 = vdwg.mxu0
    %127 = vmatpush.msra.mxu0 0.0
    %128 = vmatpush.msra.mxu0 0.0
    %129 = vmatpush.msra.mxu0 0.0
    %130 = vmatpush.msra.mxu0 0.0
    %131 = vmatpush.msra.mxu0 0.0
    %132 = vmatpush.msra.mxu0 0.0
    %133 = vmatpush.msra.mxu0 0.0
    %134 = vmatpush.msra.mxu0 0.0
    %135 = vmatpush.msra.mxu0 %v96
    %136 = vmatpush.msra.mxu0 %v94
    %137 = vmatpush.msra.mxu0 %v92
    %138 = vmatpush.msra.mxu0 %v90
    %139 = vmatpush.msra.mxu0 %v88
    %140 = vmatpush.msra.mxu0 %v86
    %141 = vmatpush.msra.mxu0 %v84
    %142 = vmatpush.msra.mxu0 %v82
    %143 = vmatmul.f32.gmra.mxu0 %v105
    %v144 = vpop.f32.mrf.mxu0
    %v145 = vadd.f32 %v100, %v144
    %146 = vdwg.mxu0
    %v147 = vld [vmem:[#allocation8] sm:$0xff]
    %v148 = vld [vmem:[#allocation8 + $0x8] sm:$0xff]
    %v149 = vld [vmem:[#allocation8 + $0x10] sm:$0xff]
    %v150 = vld [vmem:[#allocation8 + $0x18] sm:$0xff]
    %v151 = vld [vmem:[#allocation8 + $0x20] sm:$0xff]
    %v152 = vld [vmem:[#allocation8 + $0x28] sm:$0xff]
    %v153 = vld [vmem:[#allocation8 + $0x30] sm:$0xff]
    %v154 = vld [vmem:[#allocation8 + $0x38] sm:$0xff]
    %v155 = vld [vmem:[#allocation8 + $0x40] sm:$0xff]
    %v156 = vld [vmem:[#allocation8 + $0x48] sm:$0xff]
    %v157 = vld [vmem:[#allocation8 + $0x50] sm:$0xff]
    %v158 = vld [vmem:[#allocation8 + $0x58] sm:$0xff]
    %v159 = vld [vmem:[#allocation8 + $0x60] sm:$0xff]
    %v160 = vld [vmem:[#allocation8 + $0x68] sm:$0xff]
    %v161 = vld [vmem:[#allocation8 + $0x70] sm:$0xff]
    %v162 = vld [vmem:[#allocation8 + $0x78] sm:$0xff]
    %v163 = vld [vmem:[#allocation8 + $0x80] sm:$0xff]
    %v164 = vld [vmem:[#allocation8 + $0x88] sm:$0xff]
    %v165 = vld [vmem:[#allocation8 + $0x90] sm:$0xff]
    %v166 = vld [vmem:[#allocation8 + $0x98] sm:$0xff]
    %v167 = vld [vmem:[#allocation8 + $0xa0] sm:$0xff]
    %v168 = vld [vmem:[#allocation8 + $0xa8] sm:$0xff]
    %v169 = vld [vmem:[#allocation8 + $0xb0] sm:$0xff]
    %v170 = vld [vmem:[#allocation8 + $0xb8] sm:$0xff]
    %v171 = vld [vmem:[#allocation8 + $0xc0] sm:$0xff]
    %v172 = vld [vmem:[#allocation8 + $0xc8] sm:$0xff]
    %v173 = vld [vmem:[#allocation8 + $0xd0] sm:$0xff]
    %v174 = vld [vmem:[#allocation8 + $0xd8] sm:$0xff]
    %v175 = vld [vmem:[#allocation8 + $0xe0] sm:$0xff]
    %v176 = vld [vmem:[#allocation8 + $0xe8] sm:$0xff]
    %v177 = vld [vmem:[#allocation8 + $0xf0] sm:$0xff]
    %v178 = vld [vmem:[#allocation8 + $0xf8] sm:$0xff]
    %v179 = vld [vmem:[%s4] sm:$0x1]
    %v181 = vperm.slane %v179, 0
    %183 = vmatpush.msra.mxu0 %v162
    %184 = vmatpush.msra.mxu0 %v161
    %185 = vmatpush.msra.mxu0 %v160
    %186 = vmatpush.msra.mxu0 %v159
    %187 = vmatpush.msra.mxu0 %v158
    %188 = vmatpush.msra.mxu0 %v157
    %189 = vmatpush.msra.mxu0 %v156
    %190 = vmatpush.msra.mxu0 %v155
    %191 = vmatpush.msra.mxu0 %v154
    %192 = vmatpush.msra.mxu0 %v153
    %193 = vmatpush.msra.mxu0 %v152
    %194 = vmatpush.msra.mxu0 %v151
    %195 = vmatpush.msra.mxu0 %v150
    %196 = vmatpush.msra.mxu0 %v149
    %197 = vmatpush.msra.mxu0 %v148
    %198 = vmatpush.msra.mxu0 %v147
    %199 = vmatmul.f32.gmra.mxu0 %v125
    %v200 = vpop.f32.mrf.mxu0
    %v201 = vadd.f32 %v181, %v200
    %202 = vdwg.mxu0
    %203 = vmatpush.msra.mxu0 %v178
    %204 = vmatpush.msra.mxu0 %v177
    %205 = vmatpush.msra.mxu0 %v176
    %206 = vmatpush.msra.mxu0 %v175
    %207 = vmatpush.msra.mxu0 %v174
    %208 = vmatpush.msra.mxu0 %v173
    %209 = vmatpush.msra.mxu0 %v172
    %210 = vmatpush.msra.mxu0 %v171
    %211 = vmatpush.msra.mxu0 %v170
    %212 = vmatpush.msra.mxu0 %v169
    %213 = vmatpush.msra.mxu0 %v168
    %214 = vmatpush.msra.mxu0 %v167
    %215 = vmatpush.msra.mxu0 %v166
    %216 = vmatpush.msra.mxu0 %v165
    %217 = vmatpush.msra.mxu0 %v164
    %218 = vmatpush.msra.mxu0 %v163
    %219 = vmatmul.f32.gmra.mxu0 %v145
    %v220 = vpop.f32.mrf.mxu0
    %v221 = vadd.f32 %v201, %v220
    %222 = vdwg.mxu0
    %223 = vst [vmem:[#allocation10] sm:$0xf] %v221
    // Predicated region
    $region38: #{tpu_custom_call.1} parent=1 // pred_check
      _
    $region39: #{tpu_custom_call.1} parent=1 // pred_check_branch
      %225 = sbr.rel (0) target = $region41
    $region40: #{tpu_custom_call.1} parent=1 // pred_region
      %227 = vsyncadd [#allocation4], 0
      %s229 = sshll.u32 [#allocation10], 4
      %s230 = int_to_ptr.vmem [resolvable:$true] %s229
      %s231 = sshll.u32 %s5, 4
      %s232 = int_to_ptr.hbm [resolvable:$true] %s231
      %234 = dma.vmem_to_hbm [thread:$0]  %s230, 64, %s232, [#allocation4]
    $region41: #{tpu_custom_call.1} parent=1 // pred_fallthru
      _
    // Predicated region
    $region42: #{tpu_custom_call.1} parent=1 // pred_check
      _
    $region43: #{tpu_custom_call.1} parent=1 // pred_check_branch
      %236 = sbr.rel (0) target = $region45
    $region44: #{tpu_custom_call.1} parent=1 // pred_region
      %238 = dma.done [#allocation4], 64
    $region45: #{tpu_custom_call.1} parent=1 // pred_fallthru
      _
    %239 = vsyncpa [#allocation3], 1
    %240 = vsyncpa [#allocation6], 1
    %241 = vsyncpa [#allocation9], 1
    %242 = vsyncpa [#allocation4], 1

</llo_original>
